<compile_context>
chip_gen: v6e
topology: v6e:2x2x1
jax: 0.10.0
libtpu: 0.0.40
codegen_flags: <defaults>
</compile_context>

<pallas_src>
import functools
import math
from typing import NamedTuple

import jax
import jax.numpy as jnp
from jax.experimental import pallas as pl
from jax.experimental.pallas import tpu as pltpu


def _round_up(a: int, b: int) -> int:
    return -(-a // b) * b


def _pack_factor(c_out: int) -> int:
    """How many logical output rows to pack into one (<=128-lane) output row."""
    p = 1
    while 2 * p * c_out <= 128 and 2 * p <= 16:
        p *= 2
    return p


class GaussParams(NamedTuple):
    w: jax.Array        # [p*c_in, p*c_out] block-diag replicated W^T (compute dtype)
    b: jax.Array        # [1, p*c_out]      replicated bias (f32)
    c_in: int
    c_out: int
    pack: int           # p
    tm: int             # row tile in original (unpacked) rows, multiple of 128
    vmem_limit: int     # scoped-VMEM limit handed to Mosaic


def prepare_gauss_layer(weight, bias=None, *, tm: int = 512,
                        compute_dtype=None) -> GaussParams:
    """One-time parameter prep (hoisted out of the per-call hot path).

    weight: [c_out, c_in] in torch.nn.Linear layout; bias: [c_out] or None.
    compute_dtype: e.g. jnp.bfloat16 on v6e/v7x to halve the x/W read streams
    (accumulation, bias add and exp stay in f32 inside the kernel).
    """
    weight = jnp.asarray(weight)
    c_out, c_in = weight.shape
    cdtype = jnp.dtype(compute_dtype) if compute_dtype is not None else weight.dtype

    p = _pack_factor(c_out)
    # Block-diagonal replication: [p*c_in, p*c_out] with W^T repeated on the diagonal.
    w_t = weight.T.astype(jnp.float32)
    w_packed = jnp.kron(jnp.eye(p, dtype=jnp.float32), w_t).astype(cdtype)
    b = (jnp.zeros((c_out,), jnp.float32) if bias is None
         else jnp.asarray(bias, jnp.float32))
    b_packed = jnp.tile(b, p).reshape(1, p * c_out)

    # Row-tile / VMEM budget (double-buffered x + out tiles, resident weight/bias).
    tm = max(128, _round_up(int(tm), 128))
    in_isz = jnp.dtype(cdtype).itemsize
    resident = int(w_packed.size) * in_isz + int(b_packed.size) * 4

    def vmem_need(t):
        return 2 * t * (c_in * in_isz + c_out * 4) + 2 * resident

    budget = 40 << 20            # conservative for v7x's 64 MiB physical VMEM
    while tm > 128 and vmem_need(tm) > budget:
        tm = max(128, _round_up(tm // 2, 128))
    vmem_limit = int(min(max(vmem_need(tm) + (8 << 20), 32 << 20), 48 << 20))
    return GaussParams(w_packed, b_packed, int(c_in), int(c_out), int(p),
                       int(tm), vmem_limit)


def _gauss_kernel(x_ref, w_ref, b_ref, o_ref, *, neg_s2):
    # One MXU matmul + f32 bias + Gaussian.  -(scale^2) is folded into neg_s2.
    z = jnp.dot(x_ref[...], w_ref[...], preferred_element_type=jnp.float32)
    z = z + b_ref[...]                       # [tm/p, p*c_out] + [1, p*c_out]
    o_ref[...] = jnp.exp(neg_s2 * z * z).astype(o_ref.dtype)


def gauss_layer(x, params: GaussParams, scale: float = 10.0):
    """Applies exp(-(scale*(x @ W^T + b))^2) along the last axis of x.

    `scale` must be a static Python float (folded at trace time).
    """
    *lead, c_in = x.shape
    assert c_in == params.c_in, "input feature dim mismatch"
    out_dtype = x.dtype
    p, c_out = params.pack, params.c_out

    n = math.prod(lead) if lead else 1
    x2 = x.reshape(n, c_in)
    if x2.dtype != params.w.dtype:
        # In a real pipeline x should already arrive in the compute dtype so the
        # cast fuses with its producer; done here for convenience.
        x2 = x2.astype(params.w.dtype)

    # Effective row tile: never larger than the (128-rounded) row count.
    tm = min(params.tm, max(128, _round_up(n, 128)))
    n_pad = _round_up(n, tm)
    if n_pad != n:
        x2 = jnp.pad(x2, ((0, n_pad - n), (0, 0)))

    # Free row-major reinterpretation: p logical rows per packed (lane-dense) row.
    xp = x2.reshape(n_pad // p, p * c_in)
    grid = (n_pad // tm,)

    in_isz = jnp.dtype(params.w.dtype).itemsize
    out_isz = jnp.dtype(out_dtype).itemsize
    cost = pl.CostEstimate(
        flops=2 * n_pad * c_in * c_out * p,
        transcendentals=n_pad * c_out,
        bytes_accessed=int(n_pad * c_in * in_isz
                           + int(params.w.size) * in_isz + int(params.b.size) * 4
                           + n_pad * c_out * out_isz),
    )

    kernel = functools.partial(_gauss_kernel, neg_s2=-(float(scale) ** 2))
    yp = pl.pallas_call(
        kernel,
        out_shape=jax.ShapeDtypeStruct((n_pad // p, p * c_out), out_dtype),
        grid_spec=pltpu.PrefetchScalarGridSpec(
            num_scalar_prefetch=0,
            grid=grid,
            in_specs=[
                # x row tile (lane width p*c_in).
                pl.BlockSpec((tm // p, p * c_in), lambda i: (i, 0)),
                # Resident packed weight / bias (constant block index).  They are
                # tiny here, so the default double buffering costs ~nothing;
                # pl.Buffered(1) deliberately not used to keep lowering portable.
                pl.BlockSpec((p * c_in, p * c_out), lambda i: (0, 0)),
                pl.BlockSpec((1, p * c_out), lambda i: (0, 0)),
            ],
            out_specs=pl.BlockSpec((tm // p, p * c_out), lambda i: (i, 0)),
        ),
        compiler_params=pltpu.CompilerParams(
            dimension_semantics=("parallel",),
            vmem_limit_bytes=params.vmem_limit,
        ),
        cost_estimate=cost,
    )(xp, params.w, params.b)

    y = yp.reshape(n_pad, c_out)[:n]         # undo packing (free) + drop padding
    return y.reshape(*lead, c_out)


def _ref(x, weight, bias, scale=10.0):
    z = x @ weight.T + bias
    return jnp.exp(-(scale * z) ** 2)


if __name__ == "__main__":
    key = jax.random.PRNGKey(0)
    k_x, k_w, k_b = jax.random.split(key, 3)

    # Small INR-style shapes; N = 2*300 = 600 is NOT a tile multiple, so the
    # pad/slice path and a multi-step grid (tm=256 -> 3 steps) are exercised.
    in_channels, out_channels = 32, 64
    batch, seq = 2, 300
    scale = 10.0

    # Deterministic torch.nn.Linear-style init: U(-1/sqrt(in), 1/sqrt(in)).
    bound = 1.0 / jnp.sqrt(jnp.float32(in_channels))
    weight = jax.random.uniform(k_w, (out_channels, in_channels),
                                jnp.float32, -bound, bound)
    bias = jax.random.uniform(k_b, (out_channels,), jnp.float32, -bound, bound)
    x = jax.random.uniform(k_x, (batch, seq, in_channels), jnp.float32, -1.0, 1.0)

    # ---- f32 path (default) ------------------------------------------------
    params = prepare_gauss_layer(weight, bias, tm=256)
    y = jax.block_until_ready(gauss_layer(x, params, scale))
    y_ref = _ref(x, weight, bias, scale)
    assert y.shape == (batch, seq, out_channels)
    assert jnp.allclose(y, y_ref, atol=1e-5, rtol=1e-5), "f32 mismatch vs reference"

    # ---- bf16 read-stream path (v6e/v7x suggestion) -------------------------
    xb = x.astype(jnp.bfloat16)
    params_bf16 = prepare_gauss_layer(weight, bias, tm=256,
                                      compute_dtype=jnp.bfloat16)
    yb = jax.block_until_ready(gauss_layer(xb, params_bf16, scale))
    yb_ref = _ref(xb.astype(jnp.float32),
                  weight.astype(jnp.bfloat16).astype(jnp.float32),
                  bias, scale).astype(jnp.bfloat16)
    assert yb.shape == (batch, seq, out_channels)
    assert jnp.allclose(yb.astype(jnp.float32), yb_ref.astype(jnp.float32),
                        atol=1e-2, rtol=1e-2), "bf16 mismatch vs bf16 reference"

    print("KERNEL_OK")
</pallas_src>

<mosaic_0001>
module attributes {stable_mosaic.version = 11 : i64} {
  func.func @_gauss_kernel(%arg0: i32, %arg1: memref<128x64xf32, #tpu.memory_space<vmem>>, %arg2: memref<64x128xf32, #tpu.memory_space<vmem>>, %arg3: memref<1x128xf32, #tpu.memory_space<vmem>>, %arg4: memref<128x128xf32, #tpu.memory_space<vmem>>) attributes {dimension_semantics = [#tpu.dimension_semantics<parallel>], iteration_bounds = array<i64: 3>, scalar_prefetch = 0 : i64, scratch_operands = 0 : i64, tpu.core_type = #tpu.core_type<tc>, window_params = [{transform_indices = @transform_0, window_bounds = array<i64: 128, 64>}, {pipeline_mode = #tpu.pipeline_mode<synchronous>, transform_indices = @transform_1, window_bounds = array<i64: 64, 128>}, {pipeline_mode = #tpu.pipeline_mode<synchronous>, transform_indices = @transform_2, window_bounds = array<i64: 1, 128>}, {transform_indices = @transform_3, window_bounds = array<i64: 128, 128>}]} {
    %c0 = arith.constant 0 : index
    %c0_0 = arith.constant 0 : index
    %0 = vector.load %arg1[%c0, %c0_0] : memref<128x64xf32, #tpu.memory_space<vmem>>, vector<128x64xf32>
    %c0_1 = arith.constant 0 : index
    %c0_2 = arith.constant 0 : index
    %1 = vector.load %arg2[%c0_1, %c0_2] : memref<64x128xf32, #tpu.memory_space<vmem>>, vector<64x128xf32>
    %cst = arith.constant dense<0.000000e+00> : vector<128x128xf32>
    %2 = tpu.matmul %0, %1, %cst {dimension_numbers = #tpu.dot_dimension_numbers<[1], [0], [0], [1], [0, 0, 1, 1], [], []>} : vector<128x64xf32>, vector<64x128xf32>, vector<128x128xf32> -> vector<128x128xf32>
    %c0_3 = arith.constant 0 : index
    %c0_4 = arith.constant 0 : index
    %3 = vector.load %arg3[%c0_3, %c0_4] : memref<1x128xf32, #tpu.memory_space<vmem>>, vector<1x128xf32>
    %4 = vector.broadcast %3 : vector<1x128xf32> to vector<128x128xf32>
    %5 = arith.addf %2, %4 : vector<128x128xf32>
    %cst_5 = arith.constant -1.000000e+02 : f32
    %6 = vector.broadcast %cst_5 : f32 to vector<128x128xf32>
    %7 = arith.mulf %6, %5 : vector<128x128xf32>
    %8 = arith.mulf %7, %5 : vector<128x128xf32>
    %9 = math.exp %8 : vector<128x128xf32>
    %c0_6 = arith.constant 0 : index
    %c0_7 = arith.constant 0 : index
    %10 = vector.load %arg4[%c0_6, %c0_7] : memref<128x128xf32, #tpu.memory_space<vmem>>, vector<128x128xf32>
    tpu.vector_store %arg4[%c0_6, %c0_7], %9 {strides = array<i32>} : memref<128x128xf32, #tpu.memory_space<vmem>>, vector<128x128xf32>,
    return
  }
  func.func @transform_0(%arg0: i32) -> (i32, i32) {
    %c0_i32 = arith.constant 0 : i32
    %c0_i32_0 = arith.constant 0 : i32
    return %arg0, %c0_i32 : i32, i32
  }
  func.func @transform_1(%arg0: i32) -> (i32, i32) {
    %c0_i32 = arith.constant 0 : i32
    %c0_i32_0 = arith.constant 0 : i32
    %c0_i32_1 = arith.constant 0 : i32
    return %c0_i32, %c0_i32_0 : i32, i32
  }
  func.func @transform_2(%arg0: i32) -> (i32, i32) {
    %c0_i32 = arith.constant 0 : i32
    %c0_i32_0 = arith.constant 0 : i32
    %c0_i32_1 = arith.constant 0 : i32
    return %c0_i32, %c0_i32_0 : i32, i32
  }
  func.func @transform_3(%arg0: i32) -> (i32, i32) {
    %c0_i32 = arith.constant 0 : i32
    %c0_i32_0 = arith.constant 0 : i32
    return %arg0, %c0_i32 : i32, i32
  }
}

</mosaic_0001>

<llo_original>
// kernel: tpu_custom_call.1
$region0: #{tpu_custom_call.1}
  #allocation0 [shape = 'u32[]', space=smem, size = 0x4, offset = 0x4, fixed_abs, tag = 'smem constant byte address 0x4 - core index']
  #allocation1 [shape = 'u32[144,128]{1,0:T(1,128)}', space=vmem, size = 0x12000, scoped, tag = 'internal scratch']
  %s0 = inlined_call_operand.vmem [shape: f32[384,64], index: 0, kind: input, shape index: {}]
  %s1 = inlined_call_operand.vmem [shape: f32[64,128], index: 1, kind: input, shape index: {}]
  %s2 = inlined_call_operand.vmem [shape: f32[1,128], index: 2, kind: input, shape index: {}]
  %s3 = inlined_call_operand.hbm [shape: f32[384,128], index: 3, kind: output, shape index: {}]
  %s4 = sld [smem:[#allocation0]]
  $region45: #{tpu_custom_call.1} parent=0
    _
  %s6 = ssub.s32 1, %s4
  %s7 = scalar_select 0, %s6, %s4
  $region1: #{tpu_custom_call.1} parent=0
    #allocation2 [shape = 'u8[131072]{0}', space=vmem, size = 0x20000, scoped, tag = 'output window, operand 0']
    #allocation3 [shape = 's32[2]{0}', space=sflag, size = 0x8, scoped, tag = 'scoped memory for tpu_custom_call.1']
    %8 = vsyncpa [#allocation3], 0
    %s9 = scalar_lea.sflag [#allocation3], 1
    %10 = vsyncpa %s9, 0
    loop: start=0, step=1, limit=5
    $region2: #{tpu_custom_call.1} parent=1 // loop_pre_header
      _
    $region3: #{tpu_custom_call.1} parent=1 // loop_header
      %s12 = sphi 0, %s16
      %p13 = scmp.ge.s32.totalorder %s12, 5
      %s22 = sphi 0, %s24
      %s25 = sphi 0, %s22
      %s26 = sphi 0, %s25
      %s42 = sphi 0, %s26
      %s46 = sphi 0, %s46
      %s48 = sphi 0, %s46
      %s49 = sphi 0, %s48
      %s63 = sphi 0, %s49
      %s67 = sphi 0, %s67
      %s69 = sphi 0, %s67
      %s70 = sphi 0, %s69
      %s84 = sphi 0, %s70
      %s90 = sphi 0, %s92
      %s93 = sphi 0, %s90
      %s94 = sphi 0, %s93
      %s110 = sphi 0, %s94
    $region4: #{tpu_custom_call.1} parent=1 // loop_header_branch
      %15 = sbr.rel (%p13) target = $region8
    $region5: #{tpu_custom_call.1} parent=1 // loop_body
      %s17 = ssub.s32 %s12, 1
      %s18 = ssub.s32 %s12, 2
      %s19 = sadd.s32 %s12, 1
      %s20 = ssub.s32 %s12, %s19
      %p21 = scmp.eq.s32.totalorder %s20, 0
      %s23 = sadd.s32 %s22, 1
      %s24 = scalar_select %p21, %s22, %s23
      %p27 = pneg %p21
      %p28 = scmp.eq.s32.totalorder %s12, 2
      %p29 = por %p27, %p28
      %p30 = scmp.ne.s32.totalorder %s22, %s25
      %p31 = scmp.eq.s32.totalorder %s12, 0
      %p32 = por %p30, %p31
      %p33 = scmp.ne.s32.totalorder %s22, %s25
      %p34 = scmp.eq.s32.totalorder %s17, 2
      %p35 = por %p33, %p34
      %p36 = scmp.ne.s32.totalorder %s25, %s26
      %p37 = scmp.eq.s32.totalorder %s17, 0
      %p38 = por %p36, %p37
      %p39 = scmp.ne.s32.totalorder %s25, %s26
      %p40 = scmp.eq.s32.totalorder %s18, 2
      %p41 = por %p39, %p40
      %p43 = scmp.ne.s32.totalorder %s26, %s42
      %p44 = scmp.eq.s32.totalorder %s18, 0
      %p45 = por %p43, %p44
      %s47 = sadd.s32 %s46, 1
      %p50 = scmp.eq.s32.totalorder %s12, 2
      %p51 = scmp.ne.s32.totalorder %s46, %s48
      %p52 = scmp.eq.s32.totalorder %s12, 0
      %p53 = por %p51, %p52
      %p54 = scmp.ne.s32.totalorder %s46, %s48
      %p55 = scmp.eq.s32.totalorder %s17, 2
      %p56 = por %p54, %p55
      %p57 = scmp.ne.s32.totalorder %s48, %s49
      %p58 = scmp.eq.s32.totalorder %s17, 0
      %p59 = por %p57, %p58
      %p60 = scmp.ne.s32.totalorder %s48, %s49
      %p61 = scmp.eq.s32.totalorder %s18, 2
      %p62 = por %p60, %p61
      %p64 = scmp.ne.s32.totalorder %s49, %s63
      %p65 = scmp.eq.s32.totalorder %s18, 0
      %p66 = por %p64, %p65
      %s68 = sadd.s32 %s67, 1
      %p71 = scmp.eq.s32.totalorder %s12, 2
      %p72 = scmp.ne.s32.totalorder %s67, %s69
      %p73 = scmp.eq.s32.totalorder %s12, 0
      %p74 = por %p72, %p73
      %p75 = scmp.ne.s32.totalorder %s67, %s69
      %p76 = scmp.eq.s32.totalorder %s17, 2
      %p77 = por %p75, %p76
      %p78 = scmp.ne.s32.totalorder %s69, %s70
      %p79 = scmp.eq.s32.totalorder %s17, 0
      %p80 = por %p78, %p79
      %p81 = scmp.ne.s32.totalorder %s69, %s70
      %p82 = scmp.eq.s32.totalorder %s18, 2
      %p83 = por %p81, %p82
      %p85 = scmp.ne.s32.totalorder %s70, %s84
      %p86 = scmp.eq.s32.totalorder %s18, 0
      %p87 = por %p85, %p86
      %s88 = ssub.s32 %s12, %s19
      %p89 = scmp.eq.s32.totalorder %s88, 0
      %s91 = sadd.s32 %s90, 1
      %s92 = scalar_select %p89, %s90, %s91
      %p95 = pneg %p89
      %p96 = scmp.eq.s32.totalorder %s12, 2
      %p97 = por %p95, %p96
      %p98 = scmp.ne.s32.totalorder %s90, %s93
      %p99 = scmp.eq.s32.totalorder %s12, 0
      %p100 = por %p98, %p99
      %p101 = scmp.ne.s32.totalorder %s90, %s93
      %p102 = scmp.eq.s32.totalorder %s17, 2
      %p103 = por %p101, %p102
      %p104 = scmp.ne.s32.totalorder %s93, %s94
      %p105 = scmp.eq.s32.totalorder %s17, 0
      %p106 = por %p104, %p105
      %p107 = scmp.ne.s32.totalorder %s93, %s94
      %p108 = scmp.eq.s32.totalorder %s18, 2
      %p109 = por %p107, %p108
      %p111 = scmp.ne.s32.totalorder %s94, %s110
      %p112 = scmp.eq.s32.totalorder %s18, 0
      %p113 = por %p111, %p112
      %p114 = scmp.le.s32.totalorder 1, %s12
      %p115 = scmp.lt.s32.totalorder %s12, 4
      %p116 = pnand %p114, %p115
      %p117 = pneg %p116
      // Predicated region
      $region9: #{tpu_custom_call.1} parent=5 // pred_check
        _
      $region10: #{tpu_custom_call.1} parent=5 // pred_check_branch
        %119 = sbr.rel (%p116) target = $region12
      $region11: #{tpu_custom_call.1} parent=5 // pred_region
        %s120 = ssub.s32 %s12, 1
        // Predicated region
        $region13: #{tpu_custom_call.1} parent=11 // pred_check
          %p121 = pneg %p59
        $region14: #{tpu_custom_call.1} parent=11 // pred_check_branch
          %123 = sbr.rel (%p121) target = $region16
        $region15: #{tpu_custom_call.1} parent=11 // pred_region
          _
        $region16: #{tpu_custom_call.1} parent=11 // pred_fallthru
          _
        // Predicated region
        $region17: #{tpu_custom_call.1} parent=11 // pred_check
          %p124 = pneg %p80
        $region18: #{tpu_custom_call.1} parent=11 // pred_check_branch
          %126 = sbr.rel (%p124) target = $region20
        $region19: #{tpu_custom_call.1} parent=11 // pred_region
          _
        $region20: #{tpu_custom_call.1} parent=11 // pred_fallthru
          _
      $region12: #{tpu_custom_call.1} parent=5 // pred_fallthru
        _
      %p127 = scmp.lt.s32.totalorder %s12, 3
      // Predicated region
      $region21: #{tpu_custom_call.1} parent=5 // pred_check
        %p128 = pneg %p127
      $region22: #{tpu_custom_call.1} parent=5 // pred_check_branch
        %130 = sbr.rel (%p128) target = $region24
      $region23: #{tpu_custom_call.1} parent=5 // pred_region
        // Predicated region
        $region25: #{tpu_custom_call.1} parent=23 // pred_check
          %p131 = pneg %p32
        $region26: #{tpu_custom_call.1} parent=23 // pred_check_branch
          %133 = sbr.rel (%p131) target = $region28
        $region27: #{tpu_custom_call.1} parent=23 // pred_region
          %s134 = smul.u32 16, %s12
          %p135 = scmp.lt.s32.totalorder %s134, 47
          %s136 = scalar_select %p135, %s134, 47
          %s137 = smul.addr %s136, 8
          %s138 = scalar_lea.vmem %s0, %s137
          %s139 = smul.u32 16, %s12
        $region28: #{tpu_custom_call.1} parent=23 // pred_fallthru
          _
      $region24: #{tpu_custom_call.1} parent=5 // pred_fallthru
        _
      %p140 = scmp.le.s32.totalorder 1, %s12
      %p141 = scmp.lt.s32.totalorder %s12, 4
      %p142 = pnand %p140, %p141
      %p143 = pneg %p142
      // Predicated region
      $region29: #{tpu_custom_call.1} parent=5 // pred_check
        _
      $region30: #{tpu_custom_call.1} parent=5 // pred_check_branch
        %145 = sbr.rel (%p142) target = $region32
      $region31: #{tpu_custom_call.1} parent=5 // pred_region
        %s146 = ssub.s32 %s12, 1
        %s147 = smul.u32 16, %s17
        %p148 = scmp.lt.s32.totalorder %s147, 47
        %s149 = scalar_select %p148, %s147, 47
        %s150 = smul.addr %s149, 8
        %s151 = scalar_lea.vmem %s0, %s150
        %p152 = pneg %p38
        %p153 = pneg %p35
        %p154 = pneg %p59
        %p155 = pneg %p56
        %p156 = pneg %p80
        %p157 = pneg %p77
        %p158 = pneg %p106
        %p159 = pneg %p103
        %s160 = sand.u32 %s93, 1
        %s161 = scalar_lea.sflag [#allocation3], %s160
        %s162 = sand.u32 %s93, 1
        %s163 = smul.addr %s162, 128
        %s164 = scalar_lea.vmem [#allocation2], %s163
        %s165 = smul.u32 16, %s17
        %p166 = scmp.lt.s32.totalorder %s165, 47
        %s167 = scalar_select %p166, %s165, 47
        %s168 = smul.addr %s167, 8
        %s169 = scalar_lea.vmem %s0, %s168
        %s170 = smul.u32 16, %s17
        %s171 = smul.u32 16, %s17
        %v172 = vld [vmem:[%s169] sm:$0xff]
        %v173 = vld [vmem:[%s169 + $0x8] sm:$0xff]
        %v174 = vld [vmem:[%s169 + $0x10] sm:$0xff]
        %v175 = vld [vmem:[%s169 + $0x18] sm:$0xff]
        %v176 = vld [vmem:[%s169 + $0x20] sm:$0xff]
        %v177 = vld [vmem:[%s169 + $0x28] sm:$0xff]
        %v178 = vld [vmem:[%s169 + $0x30] sm:$0xff]
        %v179 = vld [vmem:[%s169 + $0x38] sm:$0xff]
        %v180 = vld [vmem:[%s169 + $0x40] sm:$0xff]
        %v181 = vld [vmem:[%s169 + $0x48] sm:$0xff]
        %v182 = vld [vmem:[%s169 + $0x50] sm:$0xff]
        %v183 = vld [vmem:[%s169 + $0x58] sm:$0xff]
        %v184 = vld [vmem:[%s169 + $0x60] sm:$0xff]
        %v185 = vld [vmem:[%s169 + $0x68] sm:$0xff]
        %v186 = vld [vmem:[%s169 + $0x70] sm:$0xff]
        %v187 = vld [vmem:[%s169 + $0x78] sm:$0xff]
        %v188 = vld [vmem:[%s1] sm:$0xff]
        %v189 = vld [vmem:[%s1 + $0x8] sm:$0xff]
        %v190 = vld [vmem:[%s1 + $0x10] sm:$0xff]
        %v191 = vld [vmem:[%s1 + $0x18] sm:$0xff]
        %v192 = vld [vmem:[%s1 + $0x20] sm:$0xff]
        %v193 = vld [vmem:[%s1 + $0x28] sm:$0xff]
        %v194 = vld [vmem:[%s1 + $0x30] sm:$0xff]
        %v195 = vld [vmem:[%s1 + $0x38] sm:$0xff]
        %v196 = vld [vmem:[%s2] sm:$0x1]
        %v198 = vlaneseq
        %v199 = vshrl.u32 %v198, 7
        %v200 = vsub.s32 0, %v199
        %v201 = vrot.slane %v196, %v200
        %vm203 = vcmask 523264
        %v205 = vsel %vm203, %v172, 0
        %v208 = vsel %vm203, %v173, 0
        %v211 = vsel %vm203, %v174, 0
        %v214 = vsel %vm203, %v175, 0
        %v217 = vsel %vm203, %v176, 0
        %v220 = vsel %vm203, %v177, 0
        %v223 = vsel %vm203, %v178, 0
        %v226 = vsel %vm203, %v179, 0
        %v229 = vsel %vm203, %v180, 0
        %v232 = vsel %vm203, %v181, 0
        %v235 = vsel %vm203, %v182, 0
        %v238 = vsel %vm203, %v183, 0
        %v241 = vsel %vm203, %v184, 0
        %v244 = vsel %vm203, %v185, 0
        %v247 = vsel %vm203, %v186, 0
        %v250 = vsel %vm203, %v187, 0
        %252 = vmatprep.subr.mxu0 0.0
        %253 = vmatpush1.msra.mxu0 0.0
        %254 = vmatprep.subr.mxu0 0.0
        %255 = vmatpush1.msra.mxu0 0.0
        %256 = vmatprep.subr.mxu0 0.0
        %257 = vmatpush1.msra.mxu0 0.0
        %258 = vmatprep.subr.mxu0 0.0
        %259 = vmatpush1.msra.mxu0 0.0
        %260 = vmatprep.subr.mxu0 0.0
        %261 = vmatpush1.msra.mxu0 0.0
        %262 = vmatprep.subr.mxu0 0.0
        %263 = vmatpush1.msra.mxu0 0.0
        %264 = vmatprep.subr.mxu0 0.0
        %265 = vmatpush1.msra.mxu0 0.0
        %266 = vmatprep.subr.mxu0 0.0
        %267 = vmatpush1.msra.mxu0 0.0
        %268 = vmatprep.subr.mxu0 0.0
        %269 = vmatpush1.msra.mxu0 %v195
        %270 = vmatprep.subr.mxu0 0.0
        %271 = vmatpush1.msra.mxu0 %v194
        %272 = vmatprep.subr.mxu0 0.0
        %273 = vmatpush1.msra.mxu0 %v193
        %274 = vmatprep.subr.mxu0 0.0
        %275 = vmatpush1.msra.mxu0 %v192
        %276 = vmatprep.subr.mxu0 0.0
        %277 = vmatpush1.msra.mxu0 %v191
        %278 = vmatprep.subr.mxu0 0.0
        %279 = vmatpush1.msra.mxu0 %v190
        %280 = vmatprep.subr.mxu0 0.0
        %281 = vmatpush1.msra.mxu0 %v189
        %282 = vmatprep.subr.mxu0 0.0
        %283 = vmatpush1.msra.mxu0 %v188
        %284 = vmatprep.subr.mxu0 0.0
        %285 = vmatpush2.msra.mxu0 0.0
        %286 = vmatprep.subr.mxu0 0.0
        %287 = vmatpush2.msra.mxu0 0.0
        %288 = vmatprep.subr.mxu0 0.0
        %289 = vmatpush2.msra.mxu0 0.0
        %290 = vmatprep.subr.mxu0 0.0
        %291 = vmatpush2.msra.mxu0 0.0
        %292 = vmatprep.subr.mxu0 0.0
        %293 = vmatpush2.msra.mxu0 0.0
        %294 = vmatprep.subr.mxu0 0.0
        %295 = vmatpush2.msra.mxu0 0.0
        %296 = vmatprep.subr.mxu0 0.0
        %297 = vmatpush2.msra.mxu0 0.0
        %298 = vmatprep.subr.mxu0 0.0
        %299 = vmatpush2.msra.mxu0 0.0
        %300 = vmatprep.subr.mxu0 0.0
        %301 = vmatpush2.msra.mxu0 0.0
        %302 = vmatprep.subr.mxu0 0.0
        %303 = vmatpush2.msra.mxu0 0.0
        %304 = vmatprep.subr.mxu0 0.0
        %305 = vmatpush2.msra.mxu0 0.0
        %306 = vmatprep.subr.mxu0 0.0
        %307 = vmatpush2.msra.mxu0 0.0
        %308 = vmatprep.subr.mxu0 0.0
        %309 = vmatpush2.msra.mxu0 0.0
        %310 = vmatprep.subr.mxu0 0.0
        %311 = vmatpush2.msra.mxu0 0.0
        %312 = vmatprep.subr.mxu0 0.0
        %313 = vmatpush2.msra.mxu0 0.0
        %314 = vmatprep.subr.mxu0 0.0
        %315 = vmatpush2.msra.mxu0 0.0
        %316 = vmatprep.mubr.f32.mxu0 0.0
        %317 = vmatmul.mubr.f32.gmra.mxu0 %v205
        %v318 = vpop.f32.mrf.mxu0
        %v319 = vadd.f32 %v201, %v318
        %v320 = vpop.f32.mrf.mxu0
        %321 = vmatprep.mubr.f32.mxu0 0.0
        %322 = vmatmul.mubr.f32.gmra.mxu0 %v208
        %v323 = vpop.f32.mrf.mxu0
        %v324 = vadd.f32 %v201, %v323
        %v325 = vpop.f32.mrf.mxu0
        %326 = vmatprep.mubr.f32.mxu0 0.0
        %327 = vmatmul.mubr.f32.gmra.mxu0 %v211
        %v328 = vpop.f32.mrf.mxu0
        %v329 = vadd.f32 %v201, %v328
        %v330 = vpop.f32.mrf.mxu0
        %331 = vmatprep.mubr.f32.mxu0 0.0
        %332 = vmatmul.mubr.f32.gmra.mxu0 %v214
        %v333 = vpop.f32.mrf.mxu0
        %v334 = vadd.f32 %v201, %v333
        %v335 = vpop.f32.mrf.mxu0
        %336 = vmatprep.mubr.f32.mxu0 0.0
        %337 = vmatmul.mubr.f32.gmra.mxu0 %v217
        %v338 = vpop.f32.mrf.mxu0
        %v339 = vadd.f32 %v201, %v338
        %v340 = vpop.f32.mrf.mxu0
        %341 = vmatprep.mubr.f32.mxu0 0.0
        %342 = vmatmul.mubr.f32.gmra.mxu0 %v220
        %v343 = vpop.f32.mrf.mxu0
        %v344 = vadd.f32 %v201, %v343
        %v345 = vpop.f32.mrf.mxu0
        %346 = vmatprep.mubr.f32.mxu0 0.0
        %347 = vmatmul.mubr.f32.gmra.mxu0 %v223
        %v348 = vpop.f32.mrf.mxu0
        %v349 = vadd.f32 %v201, %v348
        %v350 = vpop.f32.mrf.mxu0
        %351 = vmatprep.mubr.f32.mxu0 0.0
        %352 = vmatmul.mubr.f32.gmra.mxu0 %v226
        %v353 = vpop.f32.mrf.mxu0
        %v354 = vadd.f32 %v201, %v353
        %v355 = vpop.f32.mrf.mxu0
        %356 = vmatprep.mubr.f32.mxu0 0.0
        %357 = vmatmul.mubr.f32.gmra.mxu0 %v229
        %v358 = vpop.f32.mrf.mxu0
        %v359 = vadd.f32 %v201, %v358
        %v360 = vpop.f32.mrf.mxu0
        %361 = vmatprep.mubr.f32.mxu0 0.0
        %362 = vmatmul.mubr.f32.gmra.mxu0 %v232
        %v363 = vpop.f32.mrf.mxu0
        %v364 = vadd.f32 %v201, %v363
        %v365 = vpop.f32.mrf.mxu0
        %366 = vmatprep.mubr.f32.mxu0 0.0
        %367 = vmatmul.mubr.f32.gmra.mxu0 %v235
        %v368 = vpop.f32.mrf.mxu0
        %v369 = vadd.f32 %v201, %v368
        %v370 = vpop.f32.mrf.mxu0
        %371 = vmatprep.mubr.f32.mxu0 0.0
        %372 = vmatmul.mubr.f32.gmra.mxu0 %v238
        %v373 = vpop.f32.mrf.mxu0
        %v374 = vadd.f32 %v201, %v373
        %v375 = vpop.f32.mrf.mxu0
        %376 = vmatprep.mubr.f32.mxu0 0.0
        %377 = vmatmul.mubr.f32.gmra.mxu0 %v241
        %v378 = vpop.f32.mrf.mxu0
        %v379 = vadd.f32 %v201, %v378
        %v380 = vpop.f32.mrf.mxu0
        %381 = vmatprep.mubr.f32.mxu0 0.0
        %382 = vmatmul.mubr.f32.gmra.mxu0 %v244
        %v383 = vpop.f32.mrf.mxu0
        %v384 = vadd.f32 %v201, %v383
        %v385 = vpop.f32.mrf.mxu0
        %386 = vmatprep.mubr.f32.mxu0 0.0
        %387 = vmatmul.mubr.f32.gmra.mxu0 %v247
        %v388 = vpop.f32.mrf.mxu0
        %v389 = vadd.f32 %v201, %v388
        %v390 = vpop.f32.mrf.mxu0
        %391 = vmatprep.mubr.f32.mxu0 0.0
        %392 = vmatmul.mubr.f32.gmra.mxu0 %v250
        %v393 = vpop.f32.mrf.mxu0
        %v394 = vadd.f32 %v201, %v393
        %v395 = vpop.f32.mrf.mxu0
        %396 = vdwg.mxu0
        %v397 = vmul.f32 %v319, -100.0
        %v398 = vmul.f32 %v324, -100.0
        %v399 = vmul.f32 %v329, -100.0
        %v400 = vmul.f32 %v334, -100.0
        %v401 = vmul.f32 %v339, -100.0
        %v402 = vmul.f32 %v344, -100.0
        %v403 = vmul.f32 %v349, -100.0
        %v404 = vmul.f32 %v354, -100.0
        %v405 = vmul.f32 %v359, -100.0
        %v406 = vmul.f32 %v364, -100.0
        %v407 = vmul.f32 %v369, -100.0
        %v408 = vmul.f32 %v374, -100.0
        %v409 = vmul.f32 %v379, -100.0
        %v410 = vmul.f32 %v384, -100.0
        %v411 = vmul.f32 %v389, -100.0
        %v412 = vmul.f32 %v394, -100.0
        %v413 = vmul.f32 %v397, %v319
        %v414 = vmul.f32 %v398, %v324
        %v415 = vmul.f32 %v399, %v329
        %v416 = vmul.f32 %v400, %v334
        %v417 = vmul.f32 %v401, %v339
        %v418 = vmul.f32 %v402, %v344
        %v419 = vmul.f32 %v403, %v349
        %v420 = vmul.f32 %v404, %v354
        %v421 = vmul.f32 %v405, %v359
        %v422 = vmul.f32 %v406, %v364
        %v423 = vmul.f32 %v407, %v369
        %v424 = vmul.f32 %v408, %v374
        %v425 = vmul.f32 %v409, %v379
        %v426 = vmul.f32 %v410, %v384
        %v427 = vmul.f32 %v411, %v389
        %v428 = vmul.f32 %v412, %v394
        %v429 = vmul.f32 %v413, 1.442695
        %v430 = vpow.pop %v429
        %v431 = vmul.f32 %v414, 1.442695
        %v432 = vpow.pop %v431
        %v433 = vmul.f32 %v415, 1.442695
        %v434 = vpow.pop %v433
        %v435 = vmul.f32 %v416, 1.442695
        %v436 = vpow.pop %v435
        %v437 = vmul.f32 %v417, 1.442695
        %v438 = vpow.pop %v437
        %v439 = vmul.f32 %v418, 1.442695
        %v440 = vpow.pop %v439
        %v441 = vmul.f32 %v419, 1.442695
        %v442 = vpow.pop %v441
        %v443 = vmul.f32 %v420, 1.442695
        %v444 = vpow.pop %v443
        %v445 = vmul.f32 %v421, 1.442695
        %v446 = vpow.pop %v445
        %v447 = vmul.f32 %v422, 1.442695
        %v448 = vpow.pop %v447
        %v449 = vmul.f32 %v423, 1.442695
        %v450 = vpow.pop %v449
        %v451 = vmul.f32 %v424, 1.442695
        %v452 = vpow.pop %v451
        %v453 = vmul.f32 %v425, 1.442695
        %v454 = vpow.pop %v453
        %v455 = vmul.f32 %v426, 1.442695
        %v456 = vpow.pop %v455
        %v457 = vmul.f32 %v427, 1.442695
        %v458 = vpow.pop %v457
        %v459 = vmul.f32 %v428, 1.442695
        %v460 = vpow.pop %v459
        %461 = vst [vmem:[%s164] sm:$0xff] %v430
        %462 = vst [vmem:[%s164 + $0x8] sm:$0xff] %v432
        %463 = vst [vmem:[%s164 + $0x10] sm:$0xff] %v434
        %464 = vst [vmem:[%s164 + $0x18] sm:$0xff] %v436
        %465 = vst [vmem:[%s164 + $0x20] sm:$0xff] %v438
        %466 = vst [vmem:[%s164 + $0x28] sm:$0xff] %v440
        %467 = vst [vmem:[%s164 + $0x30] sm:$0xff] %v442
        %468 = vst [vmem:[%s164 + $0x38] sm:$0xff] %v444
        %469 = vst [vmem:[%s164 + $0x40] sm:$0xff] %v446
        %470 = vst [vmem:[%s164 + $0x48] sm:$0xff] %v448
        %471 = vst [vmem:[%s164 + $0x50] sm:$0xff] %v450
        %472 = vst [vmem:[%s164 + $0x58] sm:$0xff] %v452
        %473 = vst [vmem:[%s164 + $0x60] sm:$0xff] %v454
        %474 = vst [vmem:[%s164 + $0x68] sm:$0xff] %v456
        %475 = vst [vmem:[%s164 + $0x70] sm:$0xff] %v458
        %476 = vst [vmem:[%s164 + $0x78] sm:$0xff] %v460
        %s477 = sand.u32 %s93, 1
        %s478 = scalar_lea.sflag [#allocation3], %s477
        %s479 = sand.u32 %s93, 1
        %s480 = smul.addr %s479, 128
        %s481 = scalar_lea.vmem [#allocation2], %s480
        // Predicated region
        $region33: #{tpu_custom_call.1} parent=31 // pred_check
          %p482 = pneg %p103
        $region34: #{tpu_custom_call.1} parent=31 // pred_check_branch
          %484 = sbr.rel (%p482) target = $region36
        $region35: #{tpu_custom_call.1} parent=31 // pred_region
          %s485 = smul.u32 16, %s17
          %s487 = ssub.s32 2048, 2048
          %488 = vsyncadd %s478, %s487
          %s489 = smul.addr %s485, 128
          %s490 = scalar_lea.hbm %s3, %s489
          %s491 = sshll.u32 %s481, 4
          %s492 = int_to_ptr.vmem [resolvable:$true] %s491
          %497 = dma.vmem_to_hbm [thread:$0]  %s492, 2048, %s490, %s478, 128, 128, 8
        $region36: #{tpu_custom_call.1} parent=31 // pred_fallthru
          _
      $region32: #{tpu_custom_call.1} parent=5 // pred_fallthru
        _
      %p498 = scmp.le.s32.totalorder 2, %s12
      // Predicated region
      $region37: #{tpu_custom_call.1} parent=5 // pred_check
        %p499 = pneg %p498
      $region38: #{tpu_custom_call.1} parent=5 // pred_check_branch
        %501 = sbr.rel (%p499) target = $region40
      $region39: #{tpu_custom_call.1} parent=5 // pred_region
        %s502 = ssub.s32 %s12, 2
        // Predicated region
        $region41: #{tpu_custom_call.1} parent=39 // pred_check
          %p503 = pneg %p109
        $region42: #{tpu_custom_call.1} parent=39 // pred_check_branch
          %505 = sbr.rel (%p503) target = $region44
        $region43: #{tpu_custom_call.1} parent=39 // pred_region
          %s506 = sand.u32 %s94, 1
          %s507 = scalar_lea.sflag [#allocation3], %s506
          %s508 = sand.u32 %s94, 1
          %s509 = smul.addr %s508, 128
          %s510 = scalar_lea.vmem [#allocation2], %s509
          %511 = dma.done %s507, 2048
        $region44: #{tpu_custom_call.1} parent=39 // pred_fallthru
          _
      $region40: #{tpu_custom_call.1} parent=5 // pred_fallthru
        _
    $region6: #{tpu_custom_call.1} parent=1 // loop_footer
      %s16 = sadd.s32 1, %s12
    $region7: #{tpu_custom_call.1} parent=1 // loop_footer_branch
      %11 = sbr.rel target = $region3
    $region8: #{tpu_custom_call.1} parent=1 // loop_exit
      _
    %512 = vsyncpa [#allocation3], 1
    %s513 = scalar_lea.sflag [#allocation3], 1
    %514 = vsyncpa %s513, 1

</llo_original>
